<compile_context>
chip_gen: v7x
topology: tpu7x:2x2x1
jax: 0.10.0
libtpu: 0.0.40
codegen_flags: <defaults>
</compile_context>

<pallas_src>
import functools

import jax
import jax.numpy as jnp
from jax.experimental import pallas as pl
from jax.experimental.pallas import tpu as pltpu


LANE = 128                     # vreg lane width
C_FULL_MAX = 2048              # <= this many classes: single class block, direct reduce
TC_ONLINE = 2048               # class tile (multiple of 128) for the online path
TN_MAX = 2048                  # max rows per tile
BUF_CAP = 8 * 1024 * 1024      # bytes per (single) logits VMEM buffer (x2 double-buffered)


def _round_up(x: int, m: int) -> int:
    return (x + m - 1) // m * m


def _round_down8(x: int) -> int:
    return max(8, (x // 8) * 8)


# --------------------------------------------------------------------------- #
# Kernel 1: small / medium class count (single class block, tc == C).
# --------------------------------------------------------------------------- #
def _ce_kernel_full(logits_ref, target_ref, out_ref, *, num_classes: int):
    """logits_ref: (tn, C); target_ref/out_ref: (tn, 1)."""
    x = logits_ref[...].astype(jnp.float32)                        # (tn, C)
    t = target_ref[...]                                            # (tn, 1) int32
    col = jax.lax.broadcasted_iota(jnp.int32, (1, num_classes), 1)  # (1, C)

    m = jnp.max(x, axis=1, keepdims=True)                          # (tn, 1)
    p = jnp.sum(jnp.where(col == t, x, 0.0), axis=1, keepdims=True)
    l = jnp.sum(jnp.exp(x - m), axis=1, keepdims=True)
    # NLL = logsumexp(x) - x[target]
    out_ref[...] = m + jnp.log(l) - p


# --------------------------------------------------------------------------- #
# Kernel 2: large class count (class-tiled, online LSE, lane-parallel accums).
# --------------------------------------------------------------------------- #
def _ce_kernel_online(logits_ref, target_ref, out_ref, m_sc, l_sc, p_sc, *,
                      num_classes: int, col_tile: int, mask_cols: bool):
    """logits_ref: (tn, tc); target_ref/out_ref: (tn, 1); scratch: (tn, 128)."""
    j = pl.program_id(1)

    @pl.when(j == 0)
    def _init():
        m_sc[...] = jnp.full_like(m_sc, -jnp.inf)
        l_sc[...] = jnp.zeros_like(l_sc)
        p_sc[...] = jnp.zeros_like(p_sc)

    t = target_ref[...]                                             # (tn, 1) int32
    lane_iota = jax.lax.broadcasted_iota(jnp.int32, (1, LANE), 1)   # (1, 128)
    base = j * col_tile
    n_chunks = col_tile // LANE

    def load_chunk(ci):
        xc = logits_ref[:, ci * LANE:(ci + 1) * LANE].astype(jnp.float32)
        if mask_cols:
            # Last class block can run past C: padded lanes -> -inf
            # (neutral for the max; exp(-inf - m) == 0 for the sum).
            valid = (base + ci * LANE + lane_iota) < num_classes    # (1, 128)
            xc = jnp.where(valid, xc, -jnp.inf)
        return xc

    # ---- pass 1: per-lane block max (elementwise VALU folds only, no XLU) ----
    blk_max = load_chunk(0)
    for ci in range(1, n_chunks):
        blk_max = jnp.maximum(blk_max, load_chunk(ci))

    m_prev = m_sc[...]
    m_new = jnp.maximum(m_prev, blk_max)                            # (tn, 128)
    l_acc = jnp.exp(m_prev - m_new) * l_sc[...]
    p_acc = p_sc[...]

    # ---- pass 2: per-lane exp-sum + fused target pick (VALU/EUP only) ----
    for ci in range(n_chunks):
        xc = load_chunk(ci)
        l_acc = l_acc + jnp.exp(xc - m_new)
        col = base + ci * LANE + lane_iota                          # (1, 128)
        p_acc = p_acc + jnp.where(col == t, xc, 0.0)

    m_sc[...] = m_new
    l_sc[...] = l_acc
    p_sc[...] = p_acc

    @pl.when(j == pl.num_programs(1) - 1)
    def _finalize():
        # Single cross-lane collapse per row tile (instead of per class block).
        m_lane = m_sc[...]
        m_row = jnp.max(m_lane, axis=1, keepdims=True)              # (tn, 1)
        l_row = jnp.sum(jnp.exp(m_lane - m_row) * l_sc[...],
                        axis=1, keepdims=True)
        p_row = jnp.sum(p_sc[...], axis=1, keepdims=True)
        out_ref[...] = m_row + jnp.log(l_row) - p_row


# --------------------------------------------------------------------------- #
# Wrapper
# --------------------------------------------------------------------------- #
def cross_entropy_loss(logits, target, reduction: str = "mean"):
    """Pallas cross-entropy matching nn.CrossEntropyLoss(reduction=...).

    logits: (N, C) float array;  target: (N,) integer class labels in [0, C).
    """
    assert reduction in ("none", "mean", "sum")
    n, c = logits.shape
    target_2d = target.astype(jnp.int32).reshape(n, 1)
    itemsize = jnp.dtype(logits.dtype).itemsize

    use_full = c <= C_FULL_MAX
    if use_full:
        tc = c                         # full class dim -> always a legal block dim
        area_cap = 1 * 1024 * 1024     # direct path keeps full-tile f32 temporaries
    else:
        tc = TC_ONLINE                 # multiple of 128; last block masked if ragged
        area_cap = 4 * 1024 * 1024     # chunked path only has (tn, 128) temporaries

    # ---- row-tile selection (VMEM-safe on v5e/v6e/v7x) ----
    tn = min(TN_MAX,
             _round_down8(area_cap // tc),
             _round_down8(BUF_CAP // (tc * itemsize)),
             _round_up(n, 8))
    if n > 8:
        # v7x megacore: keep >= 2 row tiles so the "parallel" axis spans both TCs.
        tn = min(tn, _round_up(pl.cdiv(n, 2), 8))
    tn = _round_down8(tn)
    rows = pl.cdiv(n, tn)

    if use_full:
        kernel = functools.partial(_ce_kernel_full, num_classes=c)
        grid_spec = pltpu.PrefetchScalarGridSpec(
            num_scalar_prefetch=0,
            grid=(rows,),
            in_specs=[
                pl.BlockSpec((tn, tc), lambda i: (i, 0)),    # logits tile
                pl.BlockSpec((tn, 1), lambda i: (i, 0)),     # targets
            ],
            out_specs=pl.BlockSpec((tn, 1), lambda i: (i, 0)),
            scratch_shapes=[],
        )
        dims = ("parallel",)
    else:
        mask_cols = (c % tc) != 0
        kernel = functools.partial(_ce_kernel_online, num_classes=c,
                                   col_tile=tc, mask_cols=mask_cols)
        grid_spec = pltpu.PrefetchScalarGridSpec(
            num_scalar_prefetch=0,
            grid=(rows, pl.cdiv(c, tc)),
            in_specs=[
                pl.BlockSpec((tn, tc), lambda i, j: (i, j)),  # logits tile
                pl.BlockSpec((tn, 1), lambda i, j: (i, 0)),   # targets (resident over j)
            ],
            out_specs=pl.BlockSpec((tn, 1), lambda i, j: (i, 0)),
            scratch_shapes=[pltpu.VMEM((tn, LANE), jnp.float32)] * 3,
        )
        dims = ("parallel", "arbitrary")

    per_row = pl.pallas_call(
        kernel,
        out_shape=jax.ShapeDtypeStruct((n, 1), jnp.float32),
        grid_spec=grid_spec,
        compiler_params=pltpu.CompilerParams(
            dimension_semantics=dims,
            vmem_limit_bytes=48 * 1024 * 1024,   # safe on v7x (64 MiB physical VMEM)
        ),
    )(logits, target_2d)[:, 0]

    if reduction == "none":
        return per_row
    if reduction == "sum":
        return jnp.sum(per_row)
    return jnp.mean(per_row)   # mean over the true N


# --------------------------------------------------------------------------- #
# Reference + demo
# --------------------------------------------------------------------------- #
def _reference(logits, target, reduction="mean"):
    logp = jax.nn.log_softmax(logits.astype(jnp.float32), axis=1)
    per_row = -jnp.take_along_axis(
        logp, target[:, None].astype(jnp.int32), axis=1)[:, 0]
    if reduction == "none":
        return per_row
    if reduction == "sum":
        return jnp.sum(per_row)
    return jnp.mean(per_row)


if __name__ == "__main__":
    key = jax.random.PRNGKey(0)
    k1, k2, k3, k4, k5, k6, k7, k8 = jax.random.split(key, 8)

    # --- 1) small demo shape (module's (N, C) logits / (N,) targets) ---
    N, C = 8, 32
    logits = jax.random.normal(k1, (N, C), dtype=jnp.float32)
    target = jax.random.randint(k2, (N,), 0, C, dtype=jnp.int32)

    loss = cross_entropy_loss(logits, target, reduction="mean")
    jax.block_until_ready(loss)
    assert jnp.allclose(loss, _reference(logits, target, "mean"),
                        atol=1e-5, rtol=1e-5)
    assert jnp.allclose(cross_entropy_loss(logits, target, "sum"),
                        _reference(logits, target, "sum"), atol=1e-5, rtol=1e-5)
    assert jnp.allclose(cross_entropy_loss(logits, target, "none"),
                        _reference(logits, target, "none"), atol=1e-5, rtol=1e-5)

    # --- 2) online path, ragged class blocks, multiple row tiles (f32) ---
    N2, C2 = 520, 2500
    logits2 = jax.random.normal(k3, (N2, C2), dtype=jnp.float32)
    target2 = jax.random.randint(k4, (N2,), 0, C2, dtype=jnp.int32)
    out2_none = cross_entropy_loss(logits2, target2, "none")
    out2_mean = cross_entropy_loss(logits2, target2, "mean")
    jax.block_until_ready((out2_none, out2_mean))
    assert jnp.allclose(out2_none, _reference(logits2, target2, "none"),
                        atol=1e-4, rtol=1e-5)
    assert jnp.allclose(out2_mean, _reference(logits2, target2, "mean"),
                        atol=1e-4, rtol=1e-5)

    # --- 3) online path with bf16 logits (native-dtype DMA, f32 math) ---
    N3, C3 = 96, 4500
    logits3 = jax.random.normal(k5, (N3, C3), dtype=jnp.float32).astype(jnp.bfloat16)
    target3 = jax.random.randint(k6, (N3,), 0, C3, dtype=jnp.int32)
    out3 = cross_entropy_loss(logits3, target3, "none")
    jax.block_until_ready(out3)
    assert jnp.allclose(out3, _reference(logits3, target3, "none"),
                        atol=1e-3, rtol=1e-3)

    # --- 4) direct (single class block) path with partial last row tile ---
    N4, C4 = 200, 300
    logits4 = jax.random.normal(k7, (N4, C4), dtype=jnp.float32)
    target4 = jax.random.randint(k8, (N4,), 0, C4, dtype=jnp.int32)
    out4 = cross_entropy_loss(logits4, target4, "mean")
    jax.block_until_ready(out4)
    assert jnp.allclose(out4, _reference(logits4, target4, "mean"),
                        atol=1e-4, rtol=1e-5)

    print("KERNEL_OK")
</pallas_src>

<mosaic_0001>
module attributes {stable_mosaic.version = 11 : i64} {
  func.func @_ce_kernel_full(%arg0: i32, %arg1: memref<8x32xf32, #tpu.memory_space<vmem>>, %arg2: memref<8x1xi32, #tpu.memory_space<vmem>>, %arg3: memref<8x1xf32, #tpu.memory_space<vmem>>) attributes {dimension_semantics = [#tpu.dimension_semantics<parallel>], iteration_bounds = array<i64: 1>, scalar_prefetch = 0 : i64, scratch_operands = 0 : i64, tpu.core_type = #tpu.core_type<tc>, window_params = [{transform_indices = @transform_0, window_bounds = array<i64: 8, 32>}, {transform_indices = @transform_1, window_bounds = array<i64: 8, 1>}, {transform_indices = @transform_2, window_bounds = array<i64: 8, 1>}]} {
    %c0 = arith.constant 0 : index
    %c0_0 = arith.constant 0 : index
    %0 = vector.load %arg1[%c0, %c0_0] : memref<8x32xf32, #tpu.memory_space<vmem>>, vector<8x32xf32>
    %c0_1 = arith.constant 0 : index
    %c0_2 = arith.constant 0 : index
    %1 = vector.load %arg2[%c0_1, %c0_2] : memref<8x1xi32, #tpu.memory_space<vmem>>, vector<8x1xi32>
    %2 = tpu.iota {dimensions = array<i32: 1>} : vector<1x32xi32>
    %cst = arith.constant dense<0xFF800000> : vector<8xf32>
    %3 = vector.multi_reduction <maximumf>, %0, %cst [1] : vector<8x32xf32> to vector<8xf32>
    %4 = vector.shape_cast %3 : vector<8xf32> to vector<8x1xf32>
    %5 = vector.broadcast %2 : vector<1x32xi32> to vector<8x32xi32>
    %6 = vector.broadcast %1 : vector<8x1xi32> to vector<8x32xi32>
    %7 = arith.cmpi eq, %5, %6 : vector<8x32xi32>
    %cst_3 = arith.constant 0.000000e+00 : f32
    %8 = vector.broadcast %cst_3 : f32 to vector<8x32xf32>
    %9 = arith.select %7, %0, %8 : vector<8x32xi1>, vector<8x32xf32>
    %cst_4 = arith.constant dense<0.000000e+00> : vector<8xf32>
    %10 = vector.multi_reduction <add>, %9, %cst_4 [1] : vector<8x32xf32> to vector<8xf32>
    %11 = vector.shape_cast %10 : vector<8xf32> to vector<8x1xf32>
    %12 = vector.broadcast %4 : vector<8x1xf32> to vector<8x32xf32>
    %13 = arith.subf %0, %12 : vector<8x32xf32>
    %14 = math.exp %13 : vector<8x32xf32>
    %cst_5 = arith.constant dense<0.000000e+00> : vector<8xf32>
    %15 = vector.multi_reduction <add>, %14, %cst_5 [1] : vector<8x32xf32> to vector<8xf32>
    %16 = vector.shape_cast %15 : vector<8xf32> to vector<8x1xf32>
    %17 = math.log %16 : vector<8x1xf32>
    %18 = arith.addf %4, %17 : vector<8x1xf32>
    %19 = arith.subf %18, %11 : vector<8x1xf32>
    %c0_6 = arith.constant 0 : index
    %c0_7 = arith.constant 0 : index
    %20 = vector.load %arg3[%c0_6, %c0_7] : memref<8x1xf32, #tpu.memory_space<vmem>>, vector<8x1xf32>
    tpu.vector_store %arg3[%c0_6, %c0_7], %19 {strides = array<i32>} : memref<8x1xf32, #tpu.memory_space<vmem>>, vector<8x1xf32>,
    return
  }
  func.func @transform_0(%arg0: i32) -> (i32, i32) {
    %c0_i32 = arith.constant 0 : i32
    %c0_i32_0 = arith.constant 0 : i32
    return %arg0, %c0_i32 : i32, i32
  }
  func.func @transform_1(%arg0: i32) -> (i32, i32) {
    %c0_i32 = arith.constant 0 : i32
    %c0_i32_0 = arith.constant 0 : i32
    return %arg0, %c0_i32 : i32, i32
  }
  func.func @transform_2(%arg0: i32) -> (i32, i32) {
    %c0_i32 = arith.constant 0 : i32
    %c0_i32_0 = arith.constant 0 : i32
    return %arg0, %c0_i32 : i32, i32
  }
}

</mosaic_0001>

<llo_original>
// kernel: tpu_custom_call.1
$region0: #{tpu_custom_call.1}
  #allocation0 [shape = 'u32[]', space=smem, size = 0x4, offset = 0x4, fixed_abs, tag = 'smem constant byte address 0x4 - core index']
  #allocation1 [shape = 'u32[144,128]{1,0:T(1,128)}', space=vmem, size = 0x12000, scoped, tag = 'internal scratch']
  %s0 = inlined_call_operand.vmem [shape: f32[8,32], index: 0, kind: input, shape index: {}]
  %s1 = inlined_call_operand.vmem [shape: s32[8,1], index: 1, kind: input, shape index: {}]
  %s2 = inlined_call_operand.vmem [shape: f32[8,1], index: 2, kind: output, shape index: {}]
  %s3 = sld [smem:[#allocation0]]
  $region18: #{tpu_custom_call.1} parent=0
    _
  %s5 = ssub.s32 1, %s3
  %s6 = scalar_select 0, %s5, %s3
  // Predicated region
  $region2: #{tpu_custom_call.1} parent=0 // pred_check
    _
  $region3: #{tpu_custom_call.1} parent=0 // pred_check_branch
    %8 = sbr.rel (0) target = $region5
  $region4: #{tpu_custom_call.1} parent=0 // pred_region
    _
  $region5: #{tpu_custom_call.1} parent=0 // pred_fallthru
    _
  // Predicated region
  $region6: #{tpu_custom_call.1} parent=0 // pred_check
    _
  $region7: #{tpu_custom_call.1} parent=0 // pred_check_branch
    %10 = sbr.rel (0) target = $region9
  $region8: #{tpu_custom_call.1} parent=0 // pred_region
    _
  $region9: #{tpu_custom_call.1} parent=0 // pred_fallthru
    _
  %v11 = vld [vmem:[%s0] sm:$0xff]
  %v12 = vld [vmem:[%s1] sm:$0xff]
  %v13 = vlaneseq
  %v14 = vand.u32 %v13, 127
  %vm15 = vcmask 261120
  %v16 = vsel %vm15, %v11, -inf
  %17 = vmax.xlane.f32.xlu0 %v16
  %v18 = vpop.xlane.xlu0 %17
  %19 = vset.pattern.permute.xlu0 0
  %20 = vperm.xlu0 %19, %v12
  %v21 = vpop.permute.xlu0 %20
  %vm22 = vcmp.eq.s32.totalorder %v14, %v21
  %v23 = vsel %vm22, %v11, 0.0
  %v24 = vsel %vm15, %v23, 0.0
  %25 = vadd.xlane.f32.xlu0 %v24
  %v26 = vpop.xlane.xlu0 %25
  %v27 = vsub.f32 %v11, %v18
  %v28 = vmul.f32 %v27, 1.442695
  %v29 = vpow.pop %v28
  %v30 = vsel %vm15, %v29, 0.0
  %31 = vadd.xlane.f32.xlu0 %v30
  %v32 = vpop.xlane.xlu0 %31
  %v33 = vlog2.pop %v32
  %v34 = vmul.f32 %v33, 0.6931472
  %v35 = vadd.f32 %v18, %v34
  %v36 = vsub.f32 %v35, %v26
  %vm37 = vcmask 7168
  %38 = vst.msk [vmem:[%s2] sm:$0xff] %vm37, %v36
  // Predicated region
  $region10: #{tpu_custom_call.1} parent=0 // pred_check
    _
  $region11: #{tpu_custom_call.1} parent=0 // pred_check_branch
    %40 = sbr.rel (0) target = $region13
  $region12: #{tpu_custom_call.1} parent=0 // pred_region
    _
  $region13: #{tpu_custom_call.1} parent=0 // pred_fallthru
    _
  // Predicated region
  $region14: #{tpu_custom_call.1} parent=0 // pred_check
    _
  $region15: #{tpu_custom_call.1} parent=0 // pred_check_branch
    %42 = sbr.rel (0) target = $region17
  $region16: #{tpu_custom_call.1} parent=0 // pred_region
    _
  $region17: #{tpu_custom_call.1} parent=0 // pred_fallthru
    _

</llo_original>
